<compile_context>
chip_gen: v7x
topology: tpu7x:2x2x1
jax: 0.10.0
libtpu: 0.0.40
codegen_flags: <defaults>
</compile_context>

<pallas_src>
import functools

import jax
import jax.numpy as jnp
from jax import lax
from jax.experimental import pallas as pl
from jax.experimental.pallas import tpu as pltpu

_INV_SQRT2 = 0.7071067811865476


def _round_up(x, m):
    return (x + m - 1) // m * m


def _tpu_defaults():
    """Generation-aware tile / VMEM defaults.

    Decoder arithmetic intensity ~= tm FLOP/byte, so tm must clear each
    part's compute-bound threshold: ~240 (v5e), ~311 (v7x), ~656 (v6e).
    """
    kind = ""
    try:
        kind = jax.devices()[0].device_kind.lower()
    except Exception:
        pass
    if "v7" in kind or "tpu7" in kind:
        # 64 MiB VMEM, 2 TensorCores/chip: medium tiles, keep >= 2 row tiles.
        return dict(tile_n=512, tile_v=2048,
                    vmem_limit_bytes=48 * 1024 * 1024, min_row_tiles=2)
    if "v6" in kind or "tpu6" in kind:
        # 128 MiB VMEM, 918 TF/s vs ~1.4 TB/s: needs the biggest row tile.
        return dict(tile_n=1024, tile_v=2048,
                    vmem_limit_bytes=96 * 1024 * 1024, min_row_tiles=1)
    if "v5" in kind or "tpu5" in kind:
        # 197 TF/s: compute-bound at modest tm; win is fewer grid steps and
        # not tripping the 16 MiB default scoped-VMEM limit.
        return dict(tile_n=512, tile_v=2048,
                    vmem_limit_bytes=64 * 1024 * 1024, min_row_tiles=1)
    # Unknown part: conservative.
    return dict(tile_n=512, tile_v=2048,
                vmem_limit_bytes=48 * 1024 * 1024, min_row_tiles=1)


def _lm_head_kernel(x_ref, w1_ref, b1_ref, gamma_ref, beta_ref,
                    w2_ref, bias_ref, o_ref, t_scratch, *, eps, inv_h):
    j = pl.program_id(1)

    # Transform stage (dense -> GELU -> LayerNorm); computed once per row
    # tile and cached in VMEM scratch for all vocab tiles of this row block.
    @pl.when(j == 0)
    def _():
        h = jnp.dot(x_ref[...], w1_ref[...],
                    preferred_element_type=jnp.float32) + b1_ref[...]
        # Exact GELU (erf-based, matches torch.nn.GELU default).
        h = 0.5 * h * (1.0 + lax.erf(h * _INV_SQRT2))
        # Single-pass LayerNorm stats over the hidden dim (f32 math).
        mean = jnp.sum(h, axis=-1, keepdims=True) * inv_h
        mean_sq = jnp.sum(h * h, axis=-1, keepdims=True) * inv_h
        var = jnp.maximum(mean_sq - mean * mean, 0.0)
        h = (h - mean) * lax.rsqrt(var + eps)
        h = h * gamma_ref[...] + beta_ref[...]
        # NOTE: cast to the compute dtype (bf16 default) here is the main
        # source of bf16-path error vs an fp32-head torch reference.
        t_scratch[...] = h.astype(t_scratch.dtype)

    # Decoder stage: (tm, H) @ (H, tn) + bias tile, f32 accumulation.
    out = jnp.dot(t_scratch[...], w2_ref[...],
                  preferred_element_type=jnp.float32) + bias_ref[...]
    o_ref[...] = out.astype(o_ref.dtype)


def prepare_lm_head_params(params, *, compute_dtype=jnp.bfloat16, tile_v=None):
    """One-time (model-load) cast + lane-pad of the big decoder weight so the
    per-call wrapper does zero extra passes over W2.  Use the same tile_v as
    the call (or None on both sides) and pass vocab_size=V to
    modern_bert_lm_head, since the stored W2 / bias may be padded."""
    if tile_v is None:
        tile_v = _tpu_defaults()["tile_v"]
    V = params["w2"].shape[1]
    tn = min(_round_up(tile_v, 128), _round_up(V, 128))
    v_pad = _round_up(V, tn)
    w2 = params["w2"].astype(compute_dtype)
    bias = params["bias"].astype(jnp.float32)
    if v_pad != V:
        w2 = jnp.pad(w2, ((0, 0), (0, v_pad - V)))
        bias = jnp.pad(bias, (0, v_pad - V))
    new = dict(params)
    new["w1"] = params["w1"].astype(compute_dtype)
    new["w2"] = w2
    new["bias"] = bias
    return new


def modern_bert_lm_head(hidden_states, params, *, eps=1e-5, vocab_size=None,
                        tile_n=None, tile_v=None,
                        compute_dtype=jnp.bfloat16, out_dtype=None,
                        vmem_limit_bytes=None):
    """hidden_states: (B, S, H) -> logits (B, S, vocab_size).

    out_dtype defaults to compute_dtype (bf16) to halve the N x V logits
    write; pass jnp.float32 for fp32 logits.  Pass params through
    prepare_lm_head_params (plus vocab_size=V) to avoid per-call W2 cast/pad.
    """
    w1, b1, gamma, beta, w2, bias = (
        params["w1"], params["b1"], params["gamma"], params["beta"],
        params["w2"], params["bias"])

    B, S, H = hidden_states.shape
    V_stored = w2.shape[1]
    V = int(vocab_size) if vocab_size is not None else V_stored
    N = B * S
    if out_dtype is None:
        out_dtype = compute_dtype

    d = _tpu_defaults()
    tile_n = d["tile_n"] if tile_n is None else tile_n
    tile_v = d["tile_v"] if tile_v is None else tile_v
    vmem_limit_bytes = (d["vmem_limit_bytes"] if vmem_limit_bytes is None
                        else vmem_limit_bytes)

    # Row tile: multiple of 8, as large as the problem / part allows.
    n_r = _round_up(N, 8)
    tm = min(_round_up(tile_n, 8), n_r)
    # Multi-TensorCore parts: keep >= min_row_tiles tiles on the parallel i
    # axis so no core idles (only bites when N is small).
    if d["min_row_tiles"] > 1 and n_r > 8:
        tm = min(tm, max(8, _round_up(pl.cdiv(n_r, d["min_row_tiles"]), 8)))
    # Vocab tile: multiple of 128 (lane-dense output => unmasked stores).
    tn = min(_round_up(tile_v, 128), _round_up(V, 128))
    n_pad = _round_up(N, tm)
    v_pad = _round_up(V_stored, tn)

    # Activations: flatten tokens, cast to the MXU compute dtype, zero-pad
    # ragged rows (padded rows are finite through LN and sliced off).
    x = hidden_states.reshape(N, H)
    if x.dtype != compute_dtype:
        x = x.astype(compute_dtype)
    if n_pad != N:
        x = jnp.pad(x, ((0, n_pad - N), (0, 0)))

    # Big operands: only cast / pad if the caller did NOT pre-prepare them.
    w1_c = w1 if w1.dtype == compute_dtype else w1.astype(compute_dtype)
    w2_c = w2 if w2.dtype == compute_dtype else w2.astype(compute_dtype)
    bias_2d = bias.reshape(1, -1)
    if bias_2d.dtype != jnp.float32:
        bias_2d = bias_2d.astype(jnp.float32)
    if v_pad != w2_c.shape[1]:
        w2_c = jnp.pad(w2_c, ((0, 0), (0, v_pad - w2_c.shape[1])))
    if v_pad != bias_2d.shape[1]:
        bias_2d = jnp.pad(bias_2d, ((0, 0), (0, v_pad - bias_2d.shape[1])))

    # Small per-feature vectors stay f32 (LN / bias math is done in f32).
    b1_2d = b1.reshape(1, H).astype(jnp.float32)
    gamma_2d = gamma.reshape(1, H).astype(jnp.float32)
    beta_2d = beta.reshape(1, H).astype(jnp.float32)

    kernel = functools.partial(_lm_head_kernel, eps=float(eps),
                               inv_h=1.0 / float(H))

    out = pl.pallas_call(
        kernel,
        out_shape=jax.ShapeDtypeStruct((n_pad, v_pad), out_dtype),
        grid_spec=pltpu.PrefetchScalarGridSpec(
            num_scalar_prefetch=0,
            grid=(n_pad // tm, v_pad // tn),
            in_specs=[
                pl.BlockSpec((tm, H), lambda i, j: (i, 0)),   # x row tile
                pl.BlockSpec((H, H), lambda i, j: (0, 0)),    # W1 (full)
                pl.BlockSpec((1, H), lambda i, j: (0, 0)),    # b1
                pl.BlockSpec((1, H), lambda i, j: (0, 0)),    # LN gamma
                pl.BlockSpec((1, H), lambda i, j: (0, 0)),    # LN beta
                pl.BlockSpec((H, tn), lambda i, j: (0, j)),   # W2 vocab tile
                pl.BlockSpec((1, tn), lambda i, j: (0, j)),   # decoder bias
            ],
            out_specs=pl.BlockSpec((tm, tn), lambda i, j: (i, j)),
            scratch_shapes=[pltpu.VMEM((tm, H), compute_dtype)],
        ),
        compiler_params=pltpu.CompilerParams(
            # j carries the t_scratch write/read -> must stay serial.
            dimension_semantics=("parallel", "arbitrary"),
            vmem_limit_bytes=int(vmem_limit_bytes),
        ),
    )(x, w1_c, b1_2d, gamma_2d, beta_2d, w2_c, bias_2d)

    return out[:N, :V].reshape(B, S, V)


def _reference(hidden_states, params, eps=1e-5):
    """Pure-JAX f32 reference mirroring the PyTorch module semantics."""
    x = hidden_states
    h = x @ params["w1"] + params["b1"]
    h = 0.5 * h * (1.0 + lax.erf(h / jnp.sqrt(2.0)))
    mean = jnp.mean(h, axis=-1, keepdims=True)
    var = jnp.mean(jnp.square(h - mean), axis=-1, keepdims=True)
    h = (h - mean) * lax.rsqrt(var + eps)
    h = h * params["gamma"] + params["beta"]
    return h @ params["w2"] + params["bias"]


if __name__ == "__main__":
    # Small synthetic config: batch=2, seq=8, hidden=32, vocab=256.
    B, S, H, V = 2, 8, 32, 256
    eps = 1e-5  # ModernBERT-style norm_eps (not torch's 1e-12 default)

    key = jax.random.PRNGKey(0)
    k_x, k_w1, k_b1, k_w2 = jax.random.split(key, 4)

    hidden_states = jax.random.normal(k_x, (B, S, H), dtype=jnp.float32)

    params = {
        "w1": jax.random.normal(k_w1, (H, H), dtype=jnp.float32) * 0.05,
        "b1": jax.random.normal(k_b1, (H,), dtype=jnp.float32) * 0.02,
        "gamma": jnp.ones((H,), dtype=jnp.float32),
        "beta": jnp.zeros((H,), dtype=jnp.float32),
        "w2": jax.random.normal(k_w2, (H, V), dtype=jnp.float32) * 0.05,
        "bias": jnp.zeros((V,), dtype=jnp.float32),
    }

    ref = _reference(hidden_states, params, eps=eps)

    # 1) f32 compute / f32 output: near-exact check.
    out_f32 = modern_bert_lm_head(hidden_states, params, eps=eps,
                                  compute_dtype=jnp.float32,
                                  out_dtype=jnp.float32)
    out_f32 = jax.block_until_ready(out_f32)
    assert out_f32.shape == (B, S, V)
    assert jnp.allclose(out_f32, ref, atol=1e-4, rtol=1e-4), "f32 mismatch"

    # 2) Default bf16 perf path with weights prepared once (no per-call
    #    W2 cast/pad); bf16 logits -> relaxed tolerance.
    prepped = prepare_lm_head_params(params)
    out_bf16 = modern_bert_lm_head(hidden_states, prepped, eps=eps,
                                   vocab_size=V)
    out_bf16 = jax.block_until_ready(out_bf16)
    assert out_bf16.shape == (B, S, V)
    assert out_bf16.dtype == jnp.bfloat16
    assert jnp.allclose(out_bf16.astype(jnp.float32), ref,
                        atol=5e-2, rtol=5e-2), "bf16 mismatch"

    # 3) Ragged shapes (N not multiple of 8, V not multiple of 128) exercise
    #    the padding path.
    hs_r = hidden_states[:, :7, :]                      # N = 14
    Vr = 200
    params_r = dict(params, w2=params["w2"][:, :Vr], bias=params["bias"][:Vr])
    out_r = modern_bert_lm_head(hs_r, params_r, eps=eps,
                                compute_dtype=jnp.float32)
    out_r = jax.block_until_ready(out_r)
    ref_r = _reference(hs_r, params_r, eps=eps)
    assert out_r.shape == (B, 7, Vr)
    assert jnp.allclose(out_r, ref_r, atol=1e-4, rtol=1e-4), "ragged mismatch"

    print("KERNEL_OK")
</pallas_src>

<mosaic_0001>
module attributes {stable_mosaic.version = 11 : i64} {
  func.func @_lm_head_kernel(%arg0: i32, %arg1: i32, %arg2: memref<16x32xf32, #tpu.memory_space<vmem>>, %arg3: memref<32x32xf32, #tpu.memory_space<vmem>>, %arg4: memref<1x32xf32, #tpu.memory_space<vmem>>, %arg5: memref<1x32xf32, #tpu.memory_space<vmem>>, %arg6: memref<1x32xf32, #tpu.memory_space<vmem>>, %arg7: memref<32x256xf32, #tpu.memory_space<vmem>>, %arg8: memref<1x256xf32, #tpu.memory_space<vmem>>, %arg9: memref<16x256xf32, #tpu.memory_space<vmem>>, %arg10: memref<16x32xf32, #tpu.memory_space<vmem>>) attributes {dimension_semantics = [#tpu.dimension_semantics<parallel>, #tpu.dimension_semantics<arbitrary>], iteration_bounds = array<i64: 1, 1>, scalar_prefetch = 0 : i64, scratch_operands = 1 : i64, tpu.core_type = #tpu.core_type<tc>, window_params = [{transform_indices = @transform_0, window_bounds = array<i64: 16, 32>}, {pipeline_mode = #tpu.pipeline_mode<synchronous>, transform_indices = @transform_1, window_bounds = array<i64: 32, 32>}, {pipeline_mode = #tpu.pipeline_mode<synchronous>, transform_indices = @transform_2, window_bounds = array<i64: 1, 32>}, {pipeline_mode = #tpu.pipeline_mode<synchronous>, transform_indices = @transform_3, window_bounds = array<i64: 1, 32>}, {pipeline_mode = #tpu.pipeline_mode<synchronous>, transform_indices = @transform_4, window_bounds = array<i64: 1, 32>}, {transform_indices = @transform_5, window_bounds = array<i64: 32, 256>}, {transform_indices = @transform_6, window_bounds = array<i64: 1, 256>}, {transform_indices = @transform_7, window_bounds = array<i64: 16, 256>}]} {
    %c0_i32 = arith.constant 0 : i32
    %0 = arith.cmpi eq, %arg1, %c0_i32 : i32
    %1 = arith.extui %0 : i1 to i32
    %c0_i32_0 = arith.constant 0 : i32
    %2 = arith.cmpi ne, %1, %c0_i32_0 : i32
    scf.if %2 {
      %c0_8 = arith.constant 0 : index
      %c0_9 = arith.constant 0 : index
      %10 = vector.load %arg2[%c0_8, %c0_9] : memref<16x32xf32, #tpu.memory_space<vmem>>, vector<16x32xf32>
      %c0_10 = arith.constant 0 : index
      %c0_11 = arith.constant 0 : index
      %11 = vector.load %arg3[%c0_10, %c0_11] : memref<32x32xf32, #tpu.memory_space<vmem>>, vector<32x32xf32>
      %cst_12 = arith.constant dense<0.000000e+00> : vector<16x32xf32>
      %12 = tpu.matmul %10, %11, %cst_12 {dimension_numbers = #tpu.dot_dimension_numbers<[1], [0], [0], [1], [0, 0, 1, 1], [], []>} : vector<16x32xf32>, vector<32x32xf32>, vector<16x32xf32> -> vector<16x32xf32>
      %c0_13 = arith.constant 0 : index
      %c0_14 = arith.constant 0 : index
      %13 = vector.load %arg4[%c0_13, %c0_14] : memref<1x32xf32, #tpu.memory_space<vmem>>, vector<1x32xf32>
      %14 = vector.broadcast %13 : vector<1x32xf32> to vector<16x32xf32>
      %15 = arith.addf %12, %14 : vector<16x32xf32>
      %cst_15 = arith.constant 5.000000e-01 : f32
      %16 = vector.broadcast %cst_15 : f32 to vector<16x32xf32>
      %17 = arith.mulf %16, %15 : vector<16x32xf32>
      %cst_16 = arith.constant 0.707106769 : f32
      %18 = vector.broadcast %cst_16 : f32 to vector<16x32xf32>
      %19 = arith.mulf %15, %18 : vector<16x32xf32>
      %20 = math.erf %19 : vector<16x32xf32>
      %cst_17 = arith.constant 1.000000e+00 : f32
      %21 = vector.broadcast %cst_17 : f32 to vector<16x32xf32>
      %22 = arith.addf %21, %20 : vector<16x32xf32>
      %23 = arith.mulf %17, %22 : vector<16x32xf32>
      %cst_18 = arith.constant dense<0.000000e+00> : vector<16xf32>
      %24 = vector.multi_reduction <add>, %23, %cst_18 [1] : vector<16x32xf32> to vector<16xf32>
      %25 = vector.shape_cast %24 : vector<16xf32> to vector<16x1xf32>
      %cst_19 = arith.constant 3.125000e-02 : f32
      %26 = vector.broadcast %cst_19 : f32 to vector<16x1xf32>
      %27 = arith.mulf %25, %26 : vector<16x1xf32>
      %28 = arith.mulf %23, %23 : vector<16x32xf32>
      %cst_20 = arith.constant dense<0.000000e+00> : vector<16xf32>
      %29 = vector.multi_reduction <add>, %28, %cst_20 [1] : vector<16x32xf32> to vector<16xf32>
      %30 = vector.shape_cast %29 : vector<16xf32> to vector<16x1xf32>
      %cst_21 = arith.constant 3.125000e-02 : f32
      %31 = vector.broadcast %cst_21 : f32 to vector<16x1xf32>
      %32 = arith.mulf %30, %31 : vector<16x1xf32>
      %33 = arith.mulf %27, %27 : vector<16x1xf32>
      %34 = arith.subf %32, %33 : vector<16x1xf32>
      %cst_22 = arith.constant 0.000000e+00 : f32
      %35 = vector.broadcast %cst_22 : f32 to vector<16x1xf32>
      %36 = arith.maximumf %34, %35 : vector<16x1xf32>
      %37 = vector.broadcast %27 : vector<16x1xf32> to vector<16x32xf32>
      %38 = arith.subf %23, %37 : vector<16x32xf32>
      %cst_23 = arith.constant 9.99999974E-6 : f32
      %39 = vector.broadcast %cst_23 : f32 to vector<16x1xf32>
      %40 = arith.addf %36, %39 : vector<16x1xf32>
      %41 = math.rsqrt %40 : vector<16x1xf32>
      %42 = vector.broadcast %41 : vector<16x1xf32> to vector<16x32xf32>
      %43 = arith.mulf %38, %42 : vector<16x32xf32>
      %c0_24 = arith.constant 0 : index
      %c0_25 = arith.constant 0 : index
      %44 = vector.load %arg5[%c0_24, %c0_25] : memref<1x32xf32, #tpu.memory_space<vmem>>, vector<1x32xf32>
      %45 = vector.broadcast %44 : vector<1x32xf32> to vector<16x32xf32>
      %46 = arith.mulf %43, %45 : vector<16x32xf32>
      %c0_26 = arith.constant 0 : index
      %c0_27 = arith.constant 0 : index
      %47 = vector.load %arg6[%c0_26, %c0_27] : memref<1x32xf32, #tpu.memory_space<vmem>>, vector<1x32xf32>
      %48 = vector.broadcast %47 : vector<1x32xf32> to vector<16x32xf32>
      %49 = arith.addf %46, %48 : vector<16x32xf32>
      %c0_28 = arith.constant 0 : index
      %c0_29 = arith.constant 0 : index
      %50 = vector.load %arg10[%c0_28, %c0_29] : memref<16x32xf32, #tpu.memory_space<vmem>>, vector<16x32xf32>
      tpu.vector_store %arg10[%c0_28, %c0_29], %49 {strides = array<i32>} : memref<16x32xf32, #tpu.memory_space<vmem>>, vector<16x32xf32>,
    } else {
    }
    %c0 = arith.constant 0 : index
    %c0_1 = arith.constant 0 : index
    %3 = vector.load %arg10[%c0, %c0_1] : memref<16x32xf32, #tpu.memory_space<vmem>>, vector<16x32xf32>
    %c0_2 = arith.constant 0 : index
    %c0_3 = arith.constant 0 : index
    %4 = vector.load %arg7[%c0_2, %c0_3] : memref<32x256xf32, #tpu.memory_space<vmem>>, vector<32x256xf32>
    %cst = arith.constant dense<0.000000e+00> : vector<16x256xf32>
    %5 = tpu.matmul %3, %4, %cst {dimension_numbers = #tpu.dot_dimension_numbers<[1], [0], [0], [1], [0, 0, 1, 1], [], []>} : vector<16x32xf32>, vector<32x256xf32>, vector<16x256xf32> -> vector<16x256xf32>
    %c0_4 = arith.constant 0 : index
    %c0_5 = arith.constant 0 : index
    %6 = vector.load %arg8[%c0_4, %c0_5] : memref<1x256xf32, #tpu.memory_space<vmem>>, vector<1x256xf32>
    %7 = vector.broadcast %6 : vector<1x256xf32> to vector<16x256xf32>
    %8 = arith.addf %5, %7 : vector<16x256xf32>
    %c0_6 = arith.constant 0 : index
    %c0_7 = arith.constant 0 : index
    %9 = vector.load %arg9[%c0_6, %c0_7] : memref<16x256xf32, #tpu.memory_space<vmem>>, vector<16x256xf32>
    tpu.vector_store %arg9[%c0_6, %c0_7], %8 {strides = array<i32>} : memref<16x256xf32, #tpu.memory_space<vmem>>, vector<16x256xf32>,
    return
  }
  func.func @transform_0(%arg0: i32, %arg1: i32) -> (i32, i32) {
    %c0_i32 = arith.constant 0 : i32
    %c0_i32_0 = arith.constant 0 : i32
    return %arg0, %c0_i32 : i32, i32
  }
  func.func @transform_1(%arg0: i32, %arg1: i32) -> (i32, i32) {
    %c0_i32 = arith.constant 0 : i32
    %c0_i32_0 = arith.constant 0 : i32
    %c0_i32_1 = arith.constant 0 : i32
    return %c0_i32, %c0_i32_0 : i32, i32
  }
  func.func @transform_2(%arg0: i32, %arg1: i32) -> (i32, i32) {
    %c0_i32 = arith.constant 0 : i32
    %c0_i32_0 = arith.constant 0 : i32
    %c0_i32_1 = arith.constant 0 : i32
    return %c0_i32, %c0_i32_0 : i32, i32
  }
  func.func @transform_3(%arg0: i32, %arg1: i32) -> (i32, i32) {
    %c0_i32 = arith.constant 0 : i32
    %c0_i32_0 = arith.constant 0 : i32
    %c0_i32_1 = arith.constant 0 : i32
    return %c0_i32, %c0_i32_0 : i32, i32
  }
  func.func @transform_4(%arg0: i32, %arg1: i32) -> (i32, i32) {
    %c0_i32 = arith.constant 0 : i32
    %c0_i32_0 = arith.constant 0 : i32
    %c0_i32_1 = arith.constant 0 : i32
    return %c0_i32, %c0_i32_0 : i32, i32
  }
  func.func @transform_5(%arg0: i32, %arg1: i32) -> (i32, i32) {
    %c0_i32 = arith.constant 0 : i32
    %c0_i32_0 = arith.constant 0 : i32
    return %c0_i32, %arg1 : i32, i32
  }
  func.func @transform_6(%arg0: i32, %arg1: i32) -> (i32, i32) {
    %c0_i32 = arith.constant 0 : i32
    %c0_i32_0 = arith.constant 0 : i32
    return %c0_i32, %arg1 : i32, i32
  }
  func.func @transform_7(%arg0: i32, %arg1: i32) -> (i32, i32) {
    %c0_i32 = arith.constant 0 : i32
    return %arg0, %arg1 : i32, i32
  }
}

</mosaic_0001>

<llo_original>
// kernel: tpu_custom_call.1
$region0: #{tpu_custom_call.1}
  #allocation0 [shape = 'u32[]', space=smem, size = 0x4, offset = 0x4, fixed_abs, tag = 'smem constant byte address 0x4 - core index']
  #allocation1 [shape = 'u32[144,128]{1,0:T(1,128)}', space=vmem, size = 0x12000, scoped, tag = 'internal scratch']
  #allocation2 [shape = 'f32[16,32]{1,0:T(8,128)}', space=vmem, size = 0x2000, scoped, tag = 'scratch operand']
  %s0 = inlined_call_operand.hbm [shape: f32[16,32], index: 0, kind: input, shape index: {}]
  %s1 = inlined_call_operand.hbm [shape: f32[32,32], index: 1, kind: input, shape index: {}]
  %s2 = inlined_call_operand.vmem [shape: f32[1,32], index: 2, kind: input, shape index: {}]
  %s3 = inlined_call_operand.vmem [shape: f32[1,32], index: 3, kind: input, shape index: {}]
  %s4 = inlined_call_operand.vmem [shape: f32[1,32], index: 4, kind: input, shape index: {}]
  %s5 = inlined_call_operand.hbm [shape: f32[32,256], index: 5, kind: input, shape index: {}]
  %s6 = inlined_call_operand.vmem [shape: f32[1,256], index: 6, kind: input, shape index: {}]
  %s7 = inlined_call_operand.hbm [shape: f32[16,256], index: 7, kind: output, shape index: {}]
  %s8 = sld [smem:[#allocation0]]
  $region54: #{tpu_custom_call.1} parent=0
    _
  %s10 = ssub.s32 1, %s8
  %s11 = scalar_select 0, %s10, %s8
  $region1: #{tpu_custom_call.1} parent=0
    #allocation3 [shape = 'u8[8192]{0}', space=vmem, size = 0x2000, scoped, tag = 'input window, operand 0, single buffered']
    #allocation4 [shape = 's32[1]{0}', space=sflag, size = 0x4, scoped, tag = 'scoped memory for tpu_custom_call.1']
    #allocation5 [shape = 's32[1]{0}', space=sflag, size = 0x4, scoped, tag = 'scoped memory for tpu_custom_call.1']
    #allocation6 [shape = 'u8[16384]{0}', space=vmem, size = 0x4000, scoped, tag = 'input window, operand 1, single buffered']
    #allocation7 [shape = 's32[1]{0}', space=sflag, size = 0x4, scoped, tag = 'scoped memory for tpu_custom_call.1']
    #allocation8 [shape = 'u8[32768]{0}', space=vmem, size = 0x8000, scoped, tag = 'input window, operand 5, single buffered']
    #allocation9 [shape = 'u8[16384]{0}', space=vmem, size = 0x4000, scoped, tag = 'output window, operand 0, single buffered']
    %12 = vsyncpa [#allocation4], 0
    %13 = vsyncpa [#allocation7], 0
    %14 = vsyncpa [#allocation5], 0
    // Predicated region
    $region2: #{tpu_custom_call.1} parent=1 // pred_check
      _
    $region3: #{tpu_custom_call.1} parent=1 // pred_check_branch
      %16 = sbr.rel (0) target = $region5
    $region4: #{tpu_custom_call.1} parent=1 // pred_region
      %s18 = ssub.s32 256, 256
      %19 = vsyncadd [#allocation4], %s18
      %s20 = sshll.u32 [#allocation3], 4
      %s21 = int_to_ptr.vmem [resolvable:$true] %s20
      %26 = dma.hbm_to_vmem [thread:$0]  %s0, 256, %s21, [#allocation4], 128, 128, 8
    $region5: #{tpu_custom_call.1} parent=1 // pred_fallthru
      _
    // Predicated region
    $region6: #{tpu_custom_call.1} parent=1 // pred_check
      _
    $region7: #{tpu_custom_call.1} parent=1 // pred_check_branch
      %28 = sbr.rel (0) target = $region9
    $region8: #{tpu_custom_call.1} parent=1 // pred_region
      %s30 = ssub.s32 512, 512
      %31 = vsyncadd [#allocation7], %s30
      %s32 = sshll.u32 [#allocation6], 4
      %s33 = int_to_ptr.vmem [resolvable:$true] %s32
      %38 = dma.hbm_to_vmem [thread:$0]  %s1, 512, %s33, [#allocation7], 128, 128, 8
    $region9: #{tpu_custom_call.1} parent=1 // pred_fallthru
      _
    // Predicated region
    $region10: #{tpu_custom_call.1} parent=1 // pred_check
      _
    $region11: #{tpu_custom_call.1} parent=1 // pred_check_branch
      %40 = sbr.rel (0) target = $region13
    $region12: #{tpu_custom_call.1} parent=1 // pred_region
      _
    $region13: #{tpu_custom_call.1} parent=1 // pred_fallthru
      _
    // Predicated region
    $region14: #{tpu_custom_call.1} parent=1 // pred_check
      _
    $region15: #{tpu_custom_call.1} parent=1 // pred_check_branch
      %42 = sbr.rel (0) target = $region17
    $region16: #{tpu_custom_call.1} parent=1 // pred_region
      _
    $region17: #{tpu_custom_call.1} parent=1 // pred_fallthru
      _
    // Predicated region
    $region18: #{tpu_custom_call.1} parent=1 // pred_check
      _
    $region19: #{tpu_custom_call.1} parent=1 // pred_check_branch
      %44 = sbr.rel (0) target = $region21
    $region20: #{tpu_custom_call.1} parent=1 // pred_region
      _
    $region21: #{tpu_custom_call.1} parent=1 // pred_fallthru
      _
    // Predicated region
    $region22: #{tpu_custom_call.1} parent=1 // pred_check
      _
    $region23: #{tpu_custom_call.1} parent=1 // pred_check_branch
      %46 = sbr.rel (0) target = $region25
    $region24: #{tpu_custom_call.1} parent=1 // pred_region
      %s48 = ssub.s32 1024, 1024
      %49 = vsyncadd [#allocation7], %s48
      %s50 = sshll.u32 [#allocation8], 4
      %s51 = int_to_ptr.vmem [resolvable:$true] %s50
      %56 = dma.hbm_to_vmem [thread:$0]  %s5, 1024, %s51, [#allocation7], 256, 256, 16
    $region25: #{tpu_custom_call.1} parent=1 // pred_fallthru
      _
    // Predicated region
    $region26: #{tpu_custom_call.1} parent=1 // pred_check
      _
    $region27: #{tpu_custom_call.1} parent=1 // pred_check_branch
      %58 = sbr.rel (0) target = $region29
    $region28: #{tpu_custom_call.1} parent=1 // pred_region
      _
    $region29: #{tpu_custom_call.1} parent=1 // pred_fallthru
      _
    // Predicated region
    $region30: #{tpu_custom_call.1} parent=1 // pred_check
      _
    $region31: #{tpu_custom_call.1} parent=1 // pred_check_branch
      %60 = sbr.rel (0) target = $region33
    $region32: #{tpu_custom_call.1} parent=1 // pred_region
      %61 = dma.done [#allocation4], 256
    $region33: #{tpu_custom_call.1} parent=1 // pred_fallthru
      _
    // Predicated region
    $region34: #{tpu_custom_call.1} parent=1 // pred_check
      _
    $region35: #{tpu_custom_call.1} parent=1 // pred_check_branch
      %63 = sbr.rel (0) target = $region37
    $region36: #{tpu_custom_call.1} parent=1 // pred_region
      %64 = dma.done [#allocation7], 512
    $region37: #{tpu_custom_call.1} parent=1 // pred_fallthru
      _
    // Predicated region
    $region38: #{tpu_custom_call.1} parent=1 // pred_check
      _
    $region39: #{tpu_custom_call.1} parent=1 // pred_check_branch
      %66 = sbr.rel (0) target = $region41
    $region40: #{tpu_custom_call.1} parent=1 // pred_region
      %67 = dma.done [#allocation7], 1024
    $region41: #{tpu_custom_call.1} parent=1 // pred_fallthru
      _
    %p68 = scmp.eq.s32.totalorder 0, 0
    // Predicated region
    $region42: #{tpu_custom_call.1} parent=1 // pred_check
      %p69 = pneg %p68
    $region43: #{tpu_custom_call.1} parent=1 // pred_check_branch
      %71 = sbr.rel (%p69) target = $region45
    $region44: #{tpu_custom_call.1} parent=1 // pred_region
      %v72 = vld [vmem:[#allocation3] sm:$0xff]
      %v73 = vld [vmem:[#allocation3 + $0x8] sm:$0xff]
      %v74 = vld [vmem:[#allocation6] sm:$0xff]
      %v75 = vld [vmem:[#allocation6 + $0x8] sm:$0xff]
      %v76 = vld [vmem:[#allocation6 + $0x10] sm:$0xff]
      %v77 = vld [vmem:[#allocation6 + $0x18] sm:$0xff]
      %v78 = vld [vmem:[%s2] sm:$0x1]
      %v80 = vlaneseq
      %v81 = vshrl.u32 %v80, 7
      %v82 = vsub.s32 0, %v81
      %v83 = vrot.slane %v78, %v82
      %vm85 = vcmask 261120
      %v87 = vsel %vm85, %v72, 0
      %v90 = vsel %vm85, %v73, 0
      %92 = vmatprep.subr.mxu0 0.0
      %93 = vmatpush1.msra.mxu0 %v74
      %94 = vmatprep.subr.mxu0 0.0
      %95 = vmatpush1.msra.mxu0 %v75
      %96 = vmatprep.subr.mxu0 0.0
      %97 = vmatpush1.msra.mxu0 %v76
      %98 = vmatprep.subr.mxu0 0.0
      %99 = vmatpush1.msra.mxu0 %v77
      %100 = vmatprep.subr.mxu0 0.0
      %101 = vmatpush1.msra.mxu0 0.0
      %102 = vmatprep.subr.mxu0 0.0
      %103 = vmatpush1.msra.mxu0 0.0
      %104 = vmatprep.subr.mxu0 0.0
      %105 = vmatpush1.msra.mxu0 0.0
      %106 = vmatprep.subr.mxu0 0.0
      %107 = vmatpush1.msra.mxu0 0.0
      %108 = vmatprep.subr.mxu0 0.0
      %109 = vmatpush1.msra.mxu0 0.0
      %110 = vmatprep.subr.mxu0 0.0
      %111 = vmatpush1.msra.mxu0 0.0
      %112 = vmatprep.subr.mxu0 0.0
      %113 = vmatpush1.msra.mxu0 0.0
      %114 = vmatprep.subr.mxu0 0.0
      %115 = vmatpush1.msra.mxu0 0.0
      %116 = vmatprep.subr.mxu0 0.0
      %117 = vmatpush1.msra.mxu0 0.0
      %118 = vmatprep.subr.mxu0 0.0
      %119 = vmatpush1.msra.mxu0 0.0
      %120 = vmatprep.subr.mxu0 0.0
      %121 = vmatpush1.msra.mxu0 0.0
      %122 = vmatprep.subr.mxu0 0.0
      %123 = vmatpush1.msra.mxu0 0.0
      %124 = vmatprep.subr.mxu0 0.0
      %125 = vmatpush1.msra.mxu0 0.0
      %126 = vmatprep.subr.mxu0 0.0
      %127 = vmatpush1.msra.mxu0 0.0
      %128 = vmatprep.subr.mxu0 0.0
      %129 = vmatpush1.msra.mxu0 0.0
      %130 = vmatprep.subr.mxu0 0.0
      %131 = vmatpush1.msra.mxu0 0.0
      %132 = vmatprep.subr.mxu0 0.0
      %133 = vmatpush1.msra.mxu0 0.0
      %134 = vmatprep.subr.mxu0 0.0
      %135 = vmatpush1.msra.mxu0 0.0
      %136 = vmatprep.subr.mxu0 0.0
      %137 = vmatpush1.msra.mxu0 0.0
      %138 = vmatprep.subr.mxu0 0.0
      %139 = vmatpush1.msra.mxu0 0.0
      %140 = vmatprep.subr.mxu0 0.0
      %141 = vmatpush1.msra.mxu0 0.0
      %142 = vmatprep.subr.mxu0 0.0
      %143 = vmatpush1.msra.mxu0 0.0
      %144 = vmatprep.subr.mxu0 0.0
      %145 = vmatpush1.msra.mxu0 0.0
      %146 = vmatprep.subr.mxu0 0.0
      %147 = vmatpush1.msra.mxu0 0.0
      %148 = vmatprep.subr.mxu0 0.0
      %149 = vmatpush1.msra.mxu0 0.0
      %150 = vmatprep.subr.mxu0 0.0
      %151 = vmatpush1.msra.mxu0 0.0
      %152 = vmatprep.subr.mxu0 0.0
      %153 = vmatpush1.msra.mxu0 0.0
      %154 = vmatprep.subr.mxu0 0.0
      %155 = vmatpush1.msra.mxu0 0.0
      %156 = vmatprep.mubr.f32.mxu0 0.0
      %157 = vmatmul.mubr.f32.gmra.mrb[0].mxu0 %v87
      %v158 = vpop.f32.mrb[0].mxu0
      %v159 = vadd.f32 %v83, %v158
      %v160 = vpop.f32.mrb[0].mxu0
      %161 = vmatprep.mubr.f32.mxu0 0.0
      %162 = vmatmul.mubr.f32.gmra.mrb[0].mxu0 %v90
      %v163 = vpop.f32.mrb[0].mxu0
      %v164 = vadd.f32 %v83, %v163
      %v165 = vpop.f32.mrb[0].mxu0
      %166 = vdwg.mxu0
      %v167 = vmul.f32 %v159, 0.5
      %v168 = vmul.f32 %v164, 0.5
      %v169 = vmul.f32 %v159, 0.70710677
      %v170 = vmul.f32 %v164, 0.70710677
      %v171 = verf.f32.pop %v169
      %v172 = verf.f32.pop %v170
      %v173 = vadd.f32 %v171, 1.0
      %v174 = vadd.f32 %v172, 1.0
      %v175 = vmul.f32 %v167, %v173
      %v176 = vmul.f32 %v168, %v174
      %v177 = vsel %vm85, %v175, 0.0
      %178 = vadd.xlane.f32.xlu0 %v177
      %v179 = vpop.xlane.xlu0 %178
      %v180 = vsel %vm85, %v176, 0.0
      %181 = vadd.xlane.f32.xlu0 %v180
      %v182 = vpop.xlane.xlu0 %181
      %v183 = vmul.f32 %v179, 0.03125
      %v184 = vmul.f32 %v182, 0.03125
      %v185 = vmul.f32 %v175, %v175
      %v186 = vmul.f32 %v176, %v176
      %v187 = vsel %vm85, %v185, 0.0
      %188 = vadd.xlane.f32.xlu0 %v187
      %v189 = vpop.xlane.xlu0 %188
      %v190 = vsel %vm85, %v186, 0.0
      %191 = vadd.xlane.f32.xlu0 %v190
      %v192 = vpop.xlane.xlu0 %191
      %v193 = vmul.f32 %v189, 0.03125
      %v194 = vmul.f32 %v192, 0.03125
      %v195 = vmul.f32 %v183, %v183
      %v196 = vmul.f32 %v184, %v184
      %v197 = vsub.f32 %v193, %v195
      %v198 = vsub.f32 %v194, %v196
      %v199 = vmax.f32 %v197, 0.0
      %v200 = vmax.f32 %v198, 0.0
      %v201 = vsub.f32 %v175, %v183
      %v202 = vsub.f32 %v176, %v184
      %v203 = vadd.f32 %v199, 1e-05
      %v204 = vadd.f32 %v200, 1e-05
      %v205 = vrsqrt.pop %v203
      %v206 = vrsqrt.pop %v204
      %v207 = vmul.f32 %v201, %v205
      %v208 = vmul.f32 %v202, %v206
      %v209 = vld [vmem:[%s3] sm:$0x1]
      %v211 = vlaneseq
      %v212 = vshrl.u32 %v211, 7
      %v213 = vsub.s32 0, %v212
      %v214 = vrot.slane %v209, %v213
      %v216 = vmul.f32 %v207, %v214
      %v217 = vmul.f32 %v208, %v214
      %v218 = vld [vmem:[%s4] sm:$0x1]
      %v220 = vlaneseq
      %v221 = vshrl.u32 %v220, 7
      %v222 = vsub.s32 0, %v221
      %v223 = vrot.slane %v218, %v222
      %v225 = vadd.f32 %v216, %v223
      %v226 = vadd.f32 %v217, %v223
      %227 = vst.msk [vmem:[#allocation2] sm:$0xff] %vm85, %v225
      %228 = vst.msk [vmem:[#allocation2 + $0x8] sm:$0xff] %vm85, %v226
    $region45: #{tpu_custom_call.1} parent=1 // pred_fallthru
      _
    %v229 = vld [vmem:[#allocation2] sm:$0xff]
    %v230 = vld [vmem:[#allocation2 + $0x8] sm:$0xff]
    %v231 = vld [vmem:[#allocation8] sm:$0xff]
    %v232 = vld [vmem:[#allocation8 + $0x8] sm:$0xff]
    %v233 = vld [vmem:[#allocation8 + $0x10] sm:$0xff]
    %v234 = vld [vmem:[#allocation8 + $0x18] sm:$0xff]
    %v235 = vld [vmem:[#allocation8 + $0x20] sm:$0xff]
    %v236 = vld [vmem:[#allocation8 + $0x28] sm:$0xff]
    %v237 = vld [vmem:[#allocation8 + $0x30] sm:$0xff]
    %v238 = vld [vmem:[#allocation8 + $0x38] sm:$0xff]
    %v239 = vld [vmem:[%s6] sm:$0x3]
    %v241 = vlaneseq
    %v242 = vshrl.u32 %v241, 7
    %v243 = vsub.s32 0, %v242
    %v244 = vrot.slane %v239, %v243
    %v245 = vlaneseq
    %v246 = vshrl.u32 %v245, 7
    %v247 = vsub.s32 1, %v246
    %v248 = vrot.slane %v239, %v247
    %vm251 = vcmask 261120
    %v253 = vsel %vm251, %v229, 0
    %v256 = vsel %vm251, %v230, 0
    %258 = vmatprep.subr.mxu0 %v232
    %259 = vmatpush1.msra.mxu0 %v231
    %260 = vmatprep.subr.mxu0 %v234
    %261 = vmatpush1.msra.mxu0 %v233
    %262 = vmatprep.subr.mxu0 %v236
    %263 = vmatpush1.msra.mxu0 %v235
    %264 = vmatprep.subr.mxu0 %v238
    %265 = vmatpush1.msra.mxu0 %v237
    %266 = vmatprep.subr.mxu0 0.0
    %267 = vmatpush1.msra.mxu0 0.0
    %268 = vmatprep.subr.mxu0 0.0
    %269 = vmatpush1.msra.mxu0 0.0
    %270 = vmatprep.subr.mxu0 0.0
    %271 = vmatpush1.msra.mxu0 0.0
    %272 = vmatprep.subr.mxu0 0.0
    %273 = vmatpush1.msra.mxu0 0.0
    %274 = vmatprep.subr.mxu0 0.0
    %275 = vmatpush1.msra.mxu0 0.0
    %276 = vmatprep.subr.mxu0 0.0
    %277 = vmatpush1.msra.mxu0 0.0
    %278 = vmatprep.subr.mxu0 0.0
    %279 = vmatpush1.msra.mxu0 0.0
    %280 = vmatprep.subr.mxu0 0.0
    %281 = vmatpush1.msra.mxu0 0.0
    %282 = vmatprep.subr.mxu0 0.0
    %283 = vmatpush1.msra.mxu0 0.0
    %284 = vmatprep.subr.mxu0 0.0
    %285 = vmatpush1.msra.mxu0 0.0
    %286 = vmatprep.subr.mxu0 0.0
    %287 = vmatpush1.msra.mxu0 0.0
    %288 = vmatprep.subr.mxu0 0.0
    %289 = vmatpush1.msra.mxu0 0.0
    %290 = vmatprep.subr.mxu0 0.0
    %291 = vmatpush1.msra.mxu0 0.0
    %292 = vmatprep.subr.mxu0 0.0
    %293 = vmatpush1.msra.mxu0 0.0
    %294 = vmatprep.subr.mxu0 0.0
    %295 = vmatpush1.msra.mxu0 0.0
    %296 = vmatprep.subr.mxu0 0.0
    %297 = vmatpush1.msra.mxu0 0.0
    %298 = vmatprep.subr.mxu0 0.0
    %299 = vmatpush1.msra.mxu0 0.0
    %300 = vmatprep.subr.mxu0 0.0
    %301 = vmatpush1.msra.mxu0 0.0
    %302 = vmatprep.subr.mxu0 0.0
    %303 = vmatpush1.msra.mxu0 0.0
    %304 = vmatprep.subr.mxu0 0.0
    %305 = vmatpush1.msra.mxu0 0.0
    %306 = vmatprep.subr.mxu0 0.0
    %307 = vmatpush1.msra.mxu0 0.0
    %308 = vmatprep.subr.mxu0 0.0
    %309 = vmatpush1.msra.mxu0 0.0
    %310 = vmatprep.subr.mxu0 0.0
    %311 = vmatpush1.msra.mxu0 0.0
    %312 = vmatprep.subr.mxu0 0.0
    %313 = vmatpush1.msra.mxu0 0.0
    %314 = vmatprep.subr.mxu0 0.0
    %315 = vmatpush1.msra.mxu0 0.0
    %316 = vmatprep.subr.mxu0 0.0
    %317 = vmatpush1.msra.mxu0 0.0
    %318 = vmatprep.subr.mxu0 0.0
    %319 = vmatpush1.msra.mxu0 0.0
    %320 = vmatprep.subr.mxu0 0.0
    %321 = vmatpush1.msra.mxu0 0.0
    %322 = vmatprep.mubr.f32.mxu0 0.0
    %323 = vmatmul.mubr.f32.gmra.mrb[0].mxu0 %v253
    %v324 = vpop.f32.mrb[0].mxu0
    %v325 = vadd.f32 %v244, %v324
    %v326 = vpop.f32.mrb[0].mxu0
    %v327 = vadd.f32 %v248, %v326
    %328 = vmatprep.mubr.f32.mxu0 0.0
    %329 = vmatmul.mubr.f32.gmra.mrb[0].mxu0 %v256
    %v330 = vpop.f32.mrb[0].mxu0
    %v331 = vadd.f32 %v244, %v330
    %v332 = vpop.f32.mrb[0].mxu0
    %v333 = vadd.f32 %v248, %v332
    %334 = vdwg.mxu0
    %335 = vst [vmem:[#allocation9] sm:$0xff] %v325
    %336 = vst [vmem:[#allocation9 + $0x8] sm:$0xff] %v327
    %337 = vst [vmem:[#allocation9 + $0x10] sm:$0xff] %v331
    %338 = vst [vmem:[#allocation9 + $0x18] sm:$0xff] %v333
    // Predicated region
    $region46: #{tpu_custom_call.1} parent=1 // pred_check
      _
    $region47: #{tpu_custom_call.1} parent=1 // pred_check_branch
      %340 = sbr.rel (0) target = $region49
    $region48: #{tpu_custom_call.1} parent=1 // pred_region
      %s342 = ssub.s32 512, 512
      %343 = vsyncadd [#allocation5], %s342
      %s344 = sshll.u32 [#allocation9], 4
      %s345 = int_to_ptr.vmem [resolvable:$true] %s344
      %350 = dma.vmem_to_hbm [thread:$0]  %s345, 512, %s7, [#allocation5], 256, 256, 16
    $region49: #{tpu_custom_call.1} parent=1 // pred_fallthru
      _
    // Predicated region
    $region50: #{tpu_custom_call.1} parent=1 // pred_check
      _
    $region51: #{tpu_custom_call.1} parent=1 // pred_check_branch
      %352 = sbr.rel (0) target = $region53
    $region52: #{tpu_custom_call.1} parent=1 // pred_region
      %353 = dma.done [#allocation5], 512
    $region53: #{tpu_custom_call.1} parent=1 // pred_fallthru
      _
    %354 = vsyncpa [#allocation4], 1
    %355 = vsyncpa [#allocation7], 1
    %356 = vsyncpa [#allocation5], 1

</llo_original>
